<compile_context>
chip_gen: v7x
topology: tpu7x:2x2x1
jax: 0.10.0
libtpu: 0.0.40
codegen_flags: <defaults>
</compile_context>

<pallas_src>
import functools
import math

import jax
import jax.numpy as jnp
from jax.experimental import pallas as pl
from jax.experimental.pallas import tpu as pltpu


def sinusoidal_pos_emb_kernel(t_ref, freqs_ref, o_ref, *, half_pad,
                              num_steps, rescale_steps):
    # t_ref:     [TB, 1]          f32 timesteps
    # freqs_ref: [1, half_pad]    f32 frequencies (zero-padded past half_dim)
    # o_ref:     [TB, 2*half_pad] output
    t = t_ref[...] / num_steps * rescale_steps          # [TB, 1]  (module order)
    arg = t * freqs_ref[...]                            # [TB, half_pad] broadcast
    # One transcendental per output lane; two lane-dense contiguous stores.
    o_ref[:, :half_pad] = jnp.sin(arg).astype(o_ref.dtype)
    o_ref[:, half_pad:] = jnp.cos(arg).astype(o_ref.dtype)


def _round_up(a, b):
    return ((a + b - 1) // b) * b


@functools.lru_cache(maxsize=None)
def _freqs_row(dim, half_pad):
    """Half-width frequency row [1, half_pad], cached per model config."""
    half_dim = dim // 2
    emb_c = math.log(10000.0) / (half_dim - 1)
    # Same jnp ops as the reference so the frequency table (and hence `arg`)
    # matches bit-for-bit.
    freqs = jnp.exp(jnp.arange(half_dim, dtype=jnp.float32) * -emb_c)
    if half_pad > half_dim:
        freqs = jnp.pad(freqs, (0, half_pad - half_dim))
    return freqs.reshape(1, half_pad)


def sinusoidal_pos_emb(x, *, dim, num_steps, rescale_steps=4000.0,
                       out_dtype=jnp.float32):
    """x: [B] int or float timesteps. Returns [B, dim] in out_dtype."""
    assert dim % 2 == 0 and dim >= 4, "dim must be even and >= 4"
    B = x.shape[0]
    half_dim = dim // 2

    # Lane-dense halves: each half-width store covers a multiple of 128 lanes.
    half_pad = _round_up(half_dim, 128)
    dim_pad = 2 * half_pad

    # Grid only for large batches (keeps v7x's 2 TCs busy and VMEM bounded);
    # small/medium B stays gridless: whole-array VMEM-resident, no pipeline
    # bookkeeping on 1-TC v5e/v6e.
    TB = 512
    use_grid = B > 1024
    if use_grid:
        B_pad = _round_up(B, TB)
    else:
        B_pad = _round_up(B, 8)          # f32 sublane-aligned rows

    t2d = x.astype(jnp.float32).reshape(B, 1)
    if B_pad != B:
        t2d = jnp.pad(t2d, ((0, B_pad - B), (0, 0)))

    freqs_row = _freqs_row(dim, half_pad)

    kernel = functools.partial(
        sinusoidal_pos_emb_kernel,
        half_pad=half_pad,
        num_steps=float(num_steps),
        rescale_steps=float(rescale_steps),
    )

    if use_grid:
        out = pl.pallas_call(
            kernel,
            out_shape=jax.ShapeDtypeStruct((B_pad, dim_pad), out_dtype),
            grid=(B_pad // TB,),
            in_specs=[
                pl.BlockSpec((TB, 1), lambda i: (i, 0)),
                pl.BlockSpec((1, half_pad), lambda i: (0, 0)),
            ],
            out_specs=pl.BlockSpec((TB, dim_pad), lambda i: (i, 0)),
            compiler_params=pltpu.CompilerParams(
                dimension_semantics=("parallel",)),
        )(t2d, freqs_row)
    else:
        out = pl.pallas_call(
            kernel,
            out_shape=jax.ShapeDtypeStruct((B_pad, dim_pad), out_dtype),
            # No grid: single invocation, whole operands resident in VMEM.
            in_specs=[
                pl.BlockSpec(memory_space=pltpu.MemorySpace.VMEM),
                pl.BlockSpec(memory_space=pltpu.MemorySpace.VMEM),
            ],
            out_specs=pl.BlockSpec(memory_space=pltpu.MemorySpace.VMEM),
        )(t2d, freqs_row)

    # Strip padding.  No-op / cheap slice when shapes were already aligned.
    if half_pad == half_dim:
        return out if B_pad == B else out[:B]
    return jnp.concatenate(
        [out[:B, :half_dim], out[:B, half_pad:half_pad + half_dim]], axis=-1)


def reference_jax(x, *, dim, num_steps, rescale_steps=4000.0):
    """Pure-JAX reference mirroring the PyTorch forward."""
    xx = x.astype(jnp.float32) / float(num_steps) * float(rescale_steps)
    half_dim = dim // 2
    emb_c = math.log(10000.0) / (half_dim - 1)
    freqs = jnp.exp(jnp.arange(half_dim, dtype=jnp.float32) * -emb_c)
    e = xx[:, None] * freqs[None, :]
    return jnp.concatenate([jnp.sin(e), jnp.cos(e)], axis=-1)


if __name__ == "__main__":
    # Small, deterministic configuration.
    B = 2
    DIM = 32
    NUM_STEPS = 100

    key = jax.random.PRNGKey(0)
    timestep = jax.random.randint(key, (B,), 0, NUM_STEPS, dtype=jnp.int32)

    out = sinusoidal_pos_emb(timestep, dim=DIM, num_steps=NUM_STEPS)
    out = jax.block_until_ready(out)

    ref = reference_jax(timestep, dim=DIM, num_steps=NUM_STEPS)
    assert out.shape == (B, DIM)
    assert out.dtype == jnp.float32
    assert jnp.allclose(out, ref, atol=1e-5, rtol=1e-5), "mismatch vs reference"

    print("KERNEL_OK")
</pallas_src>

<mosaic_0001>
module attributes {stable_mosaic.version = 11 : i64} {
  func.func @sinusoidal_pos_emb_kernel(%arg0: memref<8x1xf32, #tpu.memory_space<vmem>>, %arg1: memref<1x128xf32, #tpu.memory_space<vmem>>, %arg2: memref<8x256xf32, #tpu.memory_space<vmem>>) attributes {dimension_semantics = [], scalar_prefetch = 0 : i64, scratch_operands = 0 : i64, tpu.core_type = #tpu.core_type<tc>} {
    %c0 = arith.constant 0 : index
    %c0_0 = arith.constant 0 : index
    %0 = vector.load %arg0[%c0, %c0_0] : memref<8x1xf32, #tpu.memory_space<vmem>>, vector<8x1xf32>
    %cst = arith.constant 1.000000e+02 : f32
    %1 = vector.broadcast %cst : f32 to vector<8x1xf32>
    %2 = arith.divf %0, %1 : vector<8x1xf32>
    %cst_1 = arith.constant 4.000000e+03 : f32
    %3 = vector.broadcast %cst_1 : f32 to vector<8x1xf32>
    %4 = arith.mulf %2, %3 : vector<8x1xf32>
    %c0_2 = arith.constant 0 : index
    %c0_3 = arith.constant 0 : index
    %5 = vector.load %arg1[%c0_2, %c0_3] : memref<1x128xf32, #tpu.memory_space<vmem>>, vector<1x128xf32>
    %6 = vector.broadcast %4 : vector<8x1xf32> to vector<8x128xf32>
    %7 = vector.broadcast %5 : vector<1x128xf32> to vector<8x128xf32>
    %8 = arith.mulf %6, %7 : vector<8x128xf32>
    %9 = math.sin %8 : vector<8x128xf32>
    %c0_4 = arith.constant 0 : index
    %c0_5 = arith.constant 0 : index
    %10 = vector.load %arg2[%c0_4, %c0_5] : memref<8x256xf32, #tpu.memory_space<vmem>>, vector<8x128xf32>
    tpu.vector_store %arg2[%c0_4, %c0_5], %9 {strides = array<i32>} : memref<8x256xf32, #tpu.memory_space<vmem>>, vector<8x128xf32>,
    %11 = math.cos %8 : vector<8x128xf32>
    %c0_6 = arith.constant 0 : index
    %c128 = arith.constant 128 : index
    %12 = vector.load %arg2[%c0_6, %c128] : memref<8x256xf32, #tpu.memory_space<vmem>>, vector<8x128xf32>
    tpu.vector_store %arg2[%c0_6, %c128], %11 {strides = array<i32>} : memref<8x256xf32, #tpu.memory_space<vmem>>, vector<8x128xf32>,
    return
  }
}

</mosaic_0001>

<llo_original>
// kernel: tpu_custom_call.1
$region0: #{tpu_custom_call.1}
  #allocation0 [shape = 'u32[]', space=smem, size = 0x4, offset = 0x4, fixed_abs, tag = 'smem constant byte address 0x4 - core index']
  #allocation1 [shape = 'u32[144,128]{1,0:T(1,128)}', space=vmem, size = 0x12000, scoped, tag = 'internal scratch']
  %s0 = inlined_call_operand.vmem [shape: f32[8,1], index: 0, kind: input, shape index: {}]
  %s1 = inlined_call_operand.vmem [shape: f32[1,128], index: 1, kind: input, shape index: {}]
  %s2 = inlined_call_operand.hbm [shape: f32[8,256], index: 2, kind: output, shape index: {}]
  %s3 = sld [smem:[#allocation0]]
  $region18: #{tpu_custom_call.1} parent=0
    _
  %s5 = ssub.s32 1, %s3
  %s6 = scalar_select 0, %s5, %s3
  $region1: #{tpu_custom_call.1} parent=0
    #allocation2 [shape = 'u8[8192]{0}', space=vmem, size = 0x2000, scoped, tag = 'output window, operand 0, single buffered']
    #allocation3 [shape = 's32[1]{0}', space=sflag, size = 0x4, scoped, tag = 'scoped memory for tpu_custom_call.1']
    %7 = vsyncpa [#allocation3], 0
    // Predicated region
    $region2: #{tpu_custom_call.1} parent=1 // pred_check
      _
    $region3: #{tpu_custom_call.1} parent=1 // pred_check_branch
      %9 = sbr.rel (0) target = $region5
    $region4: #{tpu_custom_call.1} parent=1 // pred_region
      _
    $region5: #{tpu_custom_call.1} parent=1 // pred_fallthru
      _
    // Predicated region
    $region6: #{tpu_custom_call.1} parent=1 // pred_check
      _
    $region7: #{tpu_custom_call.1} parent=1 // pred_check_branch
      %11 = sbr.rel (0) target = $region9
    $region8: #{tpu_custom_call.1} parent=1 // pred_region
      _
    $region9: #{tpu_custom_call.1} parent=1 // pred_fallthru
      _
    %v12 = vld [vmem:[%s0] sm:$0xff]
    %v13 = vrcp.pop 100.0
    %v14 = vmul.f32 %v12, %v13
    %v15 = vmul.f32 %v14, 4000.0
    %v16 = vld [vmem:[%s1] sm:$0x1]
    %18 = vset.pattern.permute.xlu0 0
    %19 = vperm.xlu0 %18, %v15
    %v20 = vpop.permute.xlu0 %19
    %v23 = vlaneseq
    %v24 = vshrl.u32 %v23, 7
    %v25 = vsub.s32 0, %v24
    %v26 = vrot.slane %v16, %v25
    %v28 = vmul.f32 %v20, %v26
    %v29 = vand.u32 2147483647, %v28
    %vm30 = vcmp.le.f32.partialorder %v29, 0.7853982
    %vm31 = vcmp.lt.s32.totalorder %v28, 0
    %v32 = vand.u32 %v28, 2139095040
    %v33 = vshrl.u32 %v32, 23
    %v34 = vsub.s32 %v33, 127
    %v35 = vand.u32 2147483647, %v28
    %v36 = vand.u32 %v35, 8388607
    %v37 = vor.u32 %v36, 8388608
    %v38 = vsub.s32 0, %v37
    %v39 = vadd.s32 %v34, 1
    %vm40 = vcmp.gt.s32.totalorder %v39, 0
    %v41 = vsel %vm40, %v39, 0
    %v42 = vshrl.u32 %v41, 5
    %v43 = vand.u32 %v41, 31
    %v44 = vsub.s32 32, %v43
    %v45 = vshrl.u32 683565275, %v44
    %v46 = vshll.u32 683565275, %v43
    %v47 = vshrl.u32 2475754826, %v44
    %v48 = vor.u32 %v46, %v47
    %v49 = vshll.u32 2475754826, %v43
    %v50 = vshrl.u32 2131351028, %v44
    %v51 = vor.u32 %v49, %v50
    %v52 = vshll.u32 2131351028, %v43
    %v53 = vshrl.u32 2102212464, %v44
    %v54 = vor.u32 %v52, %v53
    %v55 = vshll.u32 2102212464, %v43
    %v56 = vshrl.u32 920167782, %v44
    %v57 = vor.u32 %v55, %v56
    %v58 = vshll.u32 920167782, %v43
    %v59 = vshrl.u32 1326507024, %v44
    %v60 = vor.u32 %v58, %v59
    %vm61 = vcmp.lt.s32.totalorder %v42, 1
    %vm62 = vcmp.lt.s32.totalorder %v42, 2
    %vm63 = vcmp.lt.s32.totalorder %v42, 3
    %vm64 = vcmp.lt.s32.totalorder %v42, 4
    %v65 = vsel %vm61, %v45, %v48
    %v66 = vsel %vm64, %v54, 2102212464
    %v67 = vsel %vm63, %v51, %v66
    %v68 = vsel %vm62, %v65, %v67
    %v69 = vsel %vm61, %v48, %v51
    %v70 = vsel %vm64, %v57, 920167782
    %v71 = vsel %vm63, %v54, %v70
    %v72 = vsel %vm62, %v69, %v71
    %v73 = vsel %vm61, %v51, %v54
    %v74 = vsel %vm64, %v60, 1326507024
    %v75 = vsel %vm63, %v57, %v74
    %v76 = vsel %vm62, %v73, %v75
    %v77 = vshll.u32 %v37, 8
    %v78 = vmul.u32.u64.compose %v77, %v76
    %v79 = vextract.low.u32 %v78
    %v80 = vextract.high.u32 %v78
    %v81 = vmul.u32.u64.compose %v77, %v72
    %v82 = vextract.low.u32 %v81
    %v83 = vextract.high.u32 %v81
    %v84 = vmul.u32 %v77, %v68
    %v85 = vadd.s32 %v80, %v82
    %vm86 = vc.u32 %v80, %v82
    %v87 = vadd.s32 %v83, 1
    %v88 = vsel %vm86, %v87, %v83
    %v89 = vadd.s32 %v84, %v88
    %v90 = vadd.s32 %v89, 536870912
    %v91 = vshrl.u32 %v90, 30
    %v92 = vshll.u32 %v91, 30
    %v93 = vsub.s32 %v89, %v92
    %vm94 = vcmp.lt.s32.totalorder %v93, 0
    %v95 = vsub.s32 0, %v93
    %v96 = vsel %vm94, %v95, %v93
    %v97 = vclz %v96
    %v98 = vsub.s32 %v97, 2
    %vm99 = vcmp.gt.s32.totalorder 0, %v98
    %v100 = vsel %vm99, 0, %v98
    %v101 = vsub.s32 32, %v100
    %v102 = vshll.u32 %v93, %v100
    %v103 = vshrl.u32 %v85, %v101
    %v104 = vor.u32 %v102, %v103
    %v105 = vsub.s32 4294967266, %v100
    %v106 = vadd.s32 %v105, 127
    %v107 = vshll.u32 %v106, 23
    %v108 = vor.u32 4788187, %v107
    %v109 = vand.u32 2147483647, %v108
    %v111 = vcvt.s32.f32 %v104
    %v112 = vmul.f32 %v111, %v109
    %v113 = vxor.u32 %v112, 2147483648
    %v114 = vsel %vm31, %v113, %v112
    %v115 = vsub.s32 4, %v91
    %v116 = vsel %vm31, %v115, %v91
    %v117 = vsel %vm30, %v28, %v114
    %v118 = vsel %vm30, 0, %v116
    %v119 = vcosq.f32.pop %v117
    %v120 = vsinq.f32.pop %v117
    %vm121 = vweird.f32 %v28
    %v122 = vadd.s32 %v118, 3
    %v123 = vand.u32 %v122, 3
    %vm124 = vcmp.lt.s32.totalorder %v123, 2
    %vm125 = vcmp.eq.s32.totalorder %v123, 0
    %v126 = vxor.u32 %v120, 2147483648
    %v127 = vsel %vm125, %v119, %v126
    %vm128 = vcmp.eq.s32.totalorder %v123, 2
    %v129 = vxor.u32 %v119, 2147483648
    %v130 = vsel %vm128, %v129, %v120
    %v131 = vsel %vm124, %v127, %v130
    %v132 = vsel %vm121, nan, %v131
    %133 = vst [vmem:[#allocation2] sm:$0xff] %v132
    %v134 = vand.u32 2147483647, %v28
    %vm135 = vcmp.le.f32.partialorder %v134, 0.7853982
    %vm136 = vcmp.lt.s32.totalorder %v28, 0
    %v137 = vand.u32 %v28, 2139095040
    %v138 = vshrl.u32 %v137, 23
    %v139 = vsub.s32 %v138, 127
    %v140 = vand.u32 2147483647, %v28
    %v141 = vand.u32 %v140, 8388607
    %v142 = vor.u32 %v141, 8388608
    %v143 = vsub.s32 0, %v142
    %v144 = vadd.s32 %v139, 1
    %vm145 = vcmp.gt.s32.totalorder %v144, 0
    %v146 = vsel %vm145, %v144, 0
    %v147 = vshrl.u32 %v146, 5
    %v148 = vand.u32 %v146, 31
    %v149 = vsub.s32 32, %v148
    %v150 = vshrl.u32 683565275, %v149
    %v151 = vshll.u32 683565275, %v148
    %v152 = vshrl.u32 2475754826, %v149
    %v153 = vor.u32 %v151, %v152
    %v154 = vshll.u32 2475754826, %v148
    %v155 = vshrl.u32 2131351028, %v149
    %v156 = vor.u32 %v154, %v155
    %v157 = vshll.u32 2131351028, %v148
    %v158 = vshrl.u32 2102212464, %v149
    %v159 = vor.u32 %v157, %v158
    %v160 = vshll.u32 2102212464, %v148
    %v161 = vshrl.u32 920167782, %v149
    %v162 = vor.u32 %v160, %v161
    %v163 = vshll.u32 920167782, %v148
    %v164 = vshrl.u32 1326507024, %v149
    %v165 = vor.u32 %v163, %v164
    %vm166 = vcmp.lt.s32.totalorder %v147, 1
    %vm167 = vcmp.lt.s32.totalorder %v147, 2
    %vm168 = vcmp.lt.s32.totalorder %v147, 3
    %vm169 = vcmp.lt.s32.totalorder %v147, 4
    %v170 = vsel %vm166, %v150, %v153
    %v171 = vsel %vm169, %v159, 2102212464
    %v172 = vsel %vm168, %v156, %v171
    %v173 = vsel %vm167, %v170, %v172
    %v174 = vsel %vm166, %v153, %v156
    %v175 = vsel %vm169, %v162, 920167782
    %v176 = vsel %vm168, %v159, %v175
    %v177 = vsel %vm167, %v174, %v176
    %v178 = vsel %vm166, %v156, %v159
    %v179 = vsel %vm169, %v165, 1326507024
    %v180 = vsel %vm168, %v162, %v179
    %v181 = vsel %vm167, %v178, %v180
    %v182 = vshll.u32 %v142, 8
    %v183 = vmul.u32.u64.compose %v182, %v181
    %v184 = vextract.low.u32 %v183
    %v185 = vextract.high.u32 %v183
    %v186 = vmul.u32.u64.compose %v182, %v177
    %v187 = vextract.low.u32 %v186
    %v188 = vextract.high.u32 %v186
    %v189 = vmul.u32 %v182, %v173
    %v190 = vadd.s32 %v185, %v187
    %vm191 = vc.u32 %v185, %v187
    %v192 = vadd.s32 %v188, 1
    %v193 = vsel %vm191, %v192, %v188
    %v194 = vadd.s32 %v189, %v193
    %v195 = vadd.s32 %v194, 536870912
    %v196 = vshrl.u32 %v195, 30
    %v197 = vshll.u32 %v196, 30
    %v198 = vsub.s32 %v194, %v197
    %vm199 = vcmp.lt.s32.totalorder %v198, 0
    %v200 = vsub.s32 0, %v198
    %v201 = vsel %vm199, %v200, %v198
    %v202 = vclz %v201
    %v203 = vsub.s32 %v202, 2
    %vm204 = vcmp.gt.s32.totalorder 0, %v203
    %v205 = vsel %vm204, 0, %v203
    %v206 = vsub.s32 32, %v205
    %v207 = vshll.u32 %v198, %v205
    %v208 = vshrl.u32 %v190, %v206
    %v209 = vor.u32 %v207, %v208
    %v210 = vsub.s32 4294967266, %v205
    %v211 = vadd.s32 %v210, 127
    %v212 = vshll.u32 %v211, 23
    %v213 = vor.u32 4788187, %v212
    %v214 = vand.u32 2147483647, %v213
    %v216 = vcvt.s32.f32 %v209
    %v217 = vmul.f32 %v216, %v214
    %v218 = vxor.u32 %v217, 2147483648
    %v219 = vsel %vm136, %v218, %v217
    %v220 = vsub.s32 4, %v196
    %v221 = vsel %vm136, %v220, %v196
    %v222 = vsel %vm135, %v28, %v219
    %v223 = vsel %vm135, 0, %v221
    %v224 = vcosq.f32.pop %v222
    %v225 = vsinq.f32.pop %v222
    %vm226 = vweird.f32 %v28
    %v227 = vand.u32 %v223, 3
    %vm228 = vcmp.lt.s32.totalorder %v227, 2
    %vm229 = vcmp.eq.s32.totalorder %v227, 0
    %v230 = vxor.u32 %v225, 2147483648
    %v231 = vsel %vm229, %v224, %v230
    %vm232 = vcmp.eq.s32.totalorder %v227, 2
    %v233 = vxor.u32 %v224, 2147483648
    %v234 = vsel %vm232, %v233, %v225
    %v235 = vsel %vm228, %v231, %v234
    %v236 = vsel %vm226, nan, %v235
    %237 = vst [vmem:[#allocation2 + $0x8] sm:$0xff] %v236
    // Predicated region
    $region10: #{tpu_custom_call.1} parent=1 // pred_check
      _
    $region11: #{tpu_custom_call.1} parent=1 // pred_check_branch
      %239 = sbr.rel (0) target = $region13
    $region12: #{tpu_custom_call.1} parent=1 // pred_region
      %s241 = ssub.s32 256, 256
      %242 = vsyncadd [#allocation3], %s241
      %s244 = sshll.u32 [#allocation2], 4
      %s245 = int_to_ptr.vmem [resolvable:$true] %s244
      %247 = dma.vmem_to_hbm [thread:$0]  %s245, 256, %s2, [#allocation3]
    $region13: #{tpu_custom_call.1} parent=1 // pred_fallthru
      _
    // Predicated region
    $region14: #{tpu_custom_call.1} parent=1 // pred_check
      _
    $region15: #{tpu_custom_call.1} parent=1 // pred_check_branch
      %249 = sbr.rel (0) target = $region17
    $region16: #{tpu_custom_call.1} parent=1 // pred_region
      %250 = dma.done [#allocation3], 256
    $region17: #{tpu_custom_call.1} parent=1 // pred_fallthru
      _
    %251 = vsyncpa [#allocation3], 1

</llo_original>
